<compile_context>
chip_gen: v5e
topology: v5e:2x2
jax: 0.10.0
libtpu: 0.0.40
codegen_flags: <defaults>
</compile_context>

<pallas_src>
import functools

import jax
import jax.numpy as jnp
from jax.experimental import pallas as pl
from jax.experimental.pallas import tpu as pltpu


def _round_up(x: int, n: int) -> int:
    return ((x + n - 1) // n) * n


def _normalized_embedding_kernel(idx_ref, w_ref, o_ref, *, m, pack, idx_is_global):
    """Gather + L2-normalize one output tile.

    idx_ref: int32 indices in SMEM.  Either this tile's indices (blocked SMEM
             input, idx_is_global=False) or the full padded index vector
             (scalar-prefetch fallback, idx_is_global=True).
    w_ref:   (n_classes, m) weight table, VMEM-resident across all grid steps.
    o_ref:   (rows // pack, pack * m) packed output tile.
    """
    rows_p, _ = o_ref.shape
    rows = rows_p * pack
    base = pl.program_id(0) * rows if idx_is_global else 0

    # Phase 1: gather.  `pack` consecutive tokens' rows are placed side by side
    # along lanes so every store (and the later normalize pass) is lane-dense.
    def gather(i, carry):
        parts = [
            w_ref[pl.ds(idx_ref[base + i * pack + j], 1), :]   # (1, m) dynamic row
            for j in range(pack)
        ]
        row = parts[0] if pack == 1 else jnp.concatenate(parts, axis=1)
        o_ref[pl.ds(i, 1), :] = row
        return carry

    jax.lax.fori_loop(0, rows_p, gather, 0, unroll=8)

    # Phase 2: one dense normalization pass over the whole tile (f32 math,
    # rsqrt on the EUP), then a single dense store.
    g = o_ref[...].astype(jnp.float32)                  # (rows_p, pack*m)
    pieces = []
    for j in range(pack):                               # pack is small & static
        blk = g[:, j * m:(j + 1) * m]                   # (rows_p, m)
        ssq = jnp.sum(blk * blk, axis=1, keepdims=True) # exact f32 sum of squares
        pieces.append(blk * jax.lax.rsqrt(ssq))
    out = pieces[0] if pack == 1 else jnp.concatenate(pieces, axis=1)
    o_ref[...] = out.astype(o_ref.dtype)


def _build_call(*, n_pad, rows, pack, weight_shape, weight_dtype,
                use_blocked_smem_idx, single_buffer_table, vmem_limit, cost):
    n_classes, m = weight_shape
    rows_p = rows // pack
    grid = (n_pad // rows,)
    out_shape = jax.ShapeDtypeStruct((n_pad // pack, pack * m), weight_dtype)
    kernel = functools.partial(
        _normalized_embedding_kernel, m=m, pack=pack,
        idx_is_global=not use_blocked_smem_idx)

    w_kwargs = {"pipeline_mode": pl.Buffered(1)} if single_buffer_table else {}

    if use_blocked_smem_idx:
        grid_spec = pl.GridSpec(
            grid=grid,
            in_specs=[
                # Per-tile indices, pipelined into SMEM each step.
                pl.BlockSpec((rows,), lambda i: (i,),
                             memory_space=pltpu.MemorySpace.SMEM),
                # Whole table, constant index_map -> copied to VMEM once, resident.
                pl.BlockSpec((n_classes, m), lambda i: (0, 0), **w_kwargs),
            ],
            out_specs=pl.BlockSpec((rows_p, pack * m), lambda i: (i, 0)),
        )
    else:
        grid_spec = pltpu.PrefetchScalarGridSpec(
            num_scalar_prefetch=1,                # all indices -> SMEM up front
            grid=grid,
            in_specs=[
                pl.BlockSpec((n_classes, m), lambda i, idx_ref: (0, 0), **w_kwargs),
            ],
            out_specs=pl.BlockSpec((rows_p, pack * m), lambda i, idx_ref: (i, 0)),
        )

    return pl.pallas_call(
        kernel,
        out_shape=out_shape,
        grid_spec=grid_spec,
        compiler_params=pltpu.CompilerParams(
            dimension_semantics=("parallel",),    # independent tiles; megacore OK
            vmem_limit_bytes=vmem_limit,
        ),
        cost_estimate=cost,
    )


def normalized_embedding(x, weight, *, target_tile_bytes=512 * 1024):
    """x: (N,) integer indices; weight: (n_classes, m) table. Returns (N, m)."""
    n = int(x.shape[0])
    n_classes, m = weight.shape
    itemsize = jnp.dtype(weight.dtype).itemsize

    # Lane-packing factor: pack tokens along lanes when m < 128 so stores are
    # full 128-lane stores (biggest measured store-path lever for small m).
    pack = 128 // m if (m < 128 and 128 % m == 0) else 1
    quantum = 8 * pack                            # packed block needs 8 sublane rows

    # Tile size: ~target_tile_bytes of output per grid step, but keep >= 2
    # steps when there is enough work so v7x megacore can shard the grid.
    rows = max(quantum,
               (target_tile_bytes // max(1, m * itemsize)) // quantum * quantum)
    rows = min(rows, max(quantum, _round_up((n + 1) // 2, quantum)))
    n_pad = _round_up(max(n, 1), rows)

    # Clamp indices so the gather always stays in bounds (PyTorch's Embedding
    # raises on OOB indices; in-range behavior is identical).  Padded rows
    # gather row 0 and are sliced off below.
    idx = jnp.clip(x.astype(jnp.int32), 0, n_classes - 1)
    if n_pad != n:
        idx = jnp.pad(idx, (0, n_pad - n))

    table_bytes = n_classes * m * itemsize
    tile_out_bytes = rows * m * itemsize
    cost = pl.CostEstimate(
        flops=3 * n_pad * m,                               # square, add, scale
        transcendentals=n_pad,                             # one rsqrt per token
        bytes_accessed=table_bytes + 2 * n_pad * m * itemsize + 4 * n_pad,
    )

    def _vmem_limit(table_bufs):
        need = table_bufs * table_bytes + 2 * tile_out_bytes + (1 << 20)
        cap = 128 << 20                                    # v5e / v6e per-core VMEM
        try:
            cap = int(pltpu.get_tpu_info().vmem_capacity_bytes)   # 64 MiB/TC on v7x
        except Exception:
            pass
        return max(32 << 20, min(int(need * 5 // 4), int(cap * 3 // 4)))

    # Preferred config first; fall back if this jax/libtpu rejects blocked-SMEM
    # index inputs or single-buffered (pl.Buffered(1)) block specs.
    configs = (
        dict(use_blocked_smem_idx=True, single_buffer_table=True, table_bufs=1),
        dict(use_blocked_smem_idx=True, single_buffer_table=False, table_bufs=2),
        dict(use_blocked_smem_idx=False, single_buffer_table=False, table_bufs=2),
    )
    out_packed = None
    last_err = None
    for cfg in configs:
        try:
            call = _build_call(
                n_pad=n_pad, rows=rows, pack=pack,
                weight_shape=(n_classes, m), weight_dtype=weight.dtype,
                use_blocked_smem_idx=cfg["use_blocked_smem_idx"],
                single_buffer_table=cfg["single_buffer_table"],
                vmem_limit=_vmem_limit(cfg["table_bufs"]),
                cost=cost,
            )
            out_packed = call(idx, weight)
            break
        except Exception as err:          # version-dependent feature support
            last_err = err
    if out_packed is None:
        raise last_err

    out = out_packed.reshape(n_pad, m)    # free row-major unpack of lane packing
    return out[:n]


def xavier_uniform(key, n_classes, m_dimensions, dtype=jnp.float32):
    # nn.init.xavier_uniform_: bound = sqrt(6 / (fan_in + fan_out))
    bound = (6.0 / (n_classes + m_dimensions)) ** 0.5
    return jax.random.uniform(key, (n_classes, m_dimensions),
                              minval=-bound, maxval=bound, dtype=dtype)


if __name__ == "__main__":
    n_classes = 32      # number of HTML tag classes
    m_dimensions = 32   # embedding dimension
    n_tokens = 8        # number of input tag indices

    key = jax.random.PRNGKey(0)
    k_w, k_x, k_x2 = jax.random.split(key, 3)
    weight = xavier_uniform(k_w, n_classes, m_dimensions)
    x = jax.random.randint(k_x, (n_tokens,), 0, n_classes, dtype=jnp.int32)

    out = jax.block_until_ready(normalized_embedding(x, weight))
    embed = weight[x]
    ref = embed / jnp.linalg.norm(embed, axis=1, keepdims=True)
    assert out.shape == (n_tokens, m_dimensions)
    assert jnp.allclose(out, ref, atol=1e-5, rtol=1e-5), \
        float(jnp.max(jnp.abs(out - ref)))

    # Second check: N not a multiple of the tile exercises index padding, the
    # lane packing, and a multi-step ("parallel") grid.
    x2 = jax.random.randint(k_x2, (50,), 0, n_classes, dtype=jnp.int32)
    out2 = jax.block_until_ready(normalized_embedding(x2, weight))
    embed2 = weight[x2]
    ref2 = embed2 / jnp.linalg.norm(embed2, axis=1, keepdims=True)
    assert out2.shape == (50, m_dimensions)
    assert jnp.allclose(out2, ref2, atol=1e-5, rtol=1e-5), \
        float(jnp.max(jnp.abs(out2 - ref2)))

    print("KERNEL_OK")
</pallas_src>

<mosaic_0001>
module attributes {stable_mosaic.version = 11 : i64} {
  func.func @_normalized_embedding_kernel(%arg0: i32, %arg1: memref<32xi32, #tpu.memory_space<smem>>, %arg2: memref<32x32xf32, #tpu.memory_space<vmem>>, %arg3: memref<8x128xf32, #tpu.memory_space<vmem>>) attributes {dimension_semantics = [#tpu.dimension_semantics<parallel>], iteration_bounds = array<i64: 1>, scalar_prefetch = 1 : i64, scratch_operands = 0 : i64, tpu.core_type = #tpu.core_type<tc>, window_params = [{pipeline_mode = #tpu.pipeline_mode<synchronous>, transform_indices = @transform_0, window_bounds = array<i64: 32, 32>}, {transform_indices = @transform_1, window_bounds = array<i64: 8, 128>}]} {
    %c32_i32 = arith.constant 32 : i32
    %0 = arith.muli %arg0, %c32_i32 : i32
    %c0_i32 = arith.constant 0 : i32
    %c4_i32 = arith.constant 4 : i32
    %1 = arith.muli %c0_i32, %c4_i32 : i32
    %2 = arith.addi %0, %1 : i32
    %c0_i32_0 = arith.constant 0 : i32
    %3 = arith.addi %2, %c0_i32_0 : i32
    %4 = arith.index_cast %3 : i32 to index
    %5 = memref.load %arg1[%4] : memref<32xi32, #tpu.memory_space<smem>>
    %6 = arith.index_cast %5 : i32 to index
    %c0 = arith.constant 0 : index
    %7 = vector.load %arg2[%6, %c0] : memref<32x32xf32, #tpu.memory_space<vmem>>, vector<1x32xf32>
    %c4_i32_1 = arith.constant 4 : i32
    %8 = arith.muli %c0_i32, %c4_i32_1 : i32
    %9 = arith.addi %0, %8 : i32
    %c1_i32 = arith.constant 1 : i32
    %10 = arith.addi %9, %c1_i32 : i32
    %11 = arith.index_cast %10 : i32 to index
    %12 = memref.load %arg1[%11] : memref<32xi32, #tpu.memory_space<smem>>
    %13 = arith.index_cast %12 : i32 to index
    %c0_2 = arith.constant 0 : index
    %14 = vector.load %arg2[%13, %c0_2] : memref<32x32xf32, #tpu.memory_space<vmem>>, vector<1x32xf32>
    %c4_i32_3 = arith.constant 4 : i32
    %15 = arith.muli %c0_i32, %c4_i32_3 : i32
    %16 = arith.addi %0, %15 : i32
    %c2_i32 = arith.constant 2 : i32
    %17 = arith.addi %16, %c2_i32 : i32
    %18 = arith.index_cast %17 : i32 to index
    %19 = memref.load %arg1[%18] : memref<32xi32, #tpu.memory_space<smem>>
    %20 = arith.index_cast %19 : i32 to index
    %c0_4 = arith.constant 0 : index
    %21 = vector.load %arg2[%20, %c0_4] : memref<32x32xf32, #tpu.memory_space<vmem>>, vector<1x32xf32>
    %c4_i32_5 = arith.constant 4 : i32
    %22 = arith.muli %c0_i32, %c4_i32_5 : i32
    %23 = arith.addi %0, %22 : i32
    %c3_i32 = arith.constant 3 : i32
    %24 = arith.addi %23, %c3_i32 : i32
    %25 = arith.index_cast %24 : i32 to index
    %26 = memref.load %arg1[%25] : memref<32xi32, #tpu.memory_space<smem>>
    %27 = arith.index_cast %26 : i32 to index
    %c0_6 = arith.constant 0 : index
    %28 = vector.load %arg2[%27, %c0_6] : memref<32x32xf32, #tpu.memory_space<vmem>>, vector<1x32xf32>
    %29 = tpu.concatenate %7, %14, %21, %28 in 1 : vector<1x32xf32>, vector<1x32xf32>, vector<1x32xf32>, vector<1x32xf32> -> vector<1x128xf32>
    %30 = arith.index_cast %c0_i32 : i32 to index
    %c0_7 = arith.constant 0 : index
    %31 = vector.load %arg3[%30, %c0_7] : memref<8x128xf32, #tpu.memory_space<vmem>>, vector<1x128xf32>
    tpu.vector_store %arg3[%30, %c0_7], %29 {strides = array<i32>} : memref<8x128xf32, #tpu.memory_space<vmem>>, vector<1x128xf32>,
    %c1_i32_8 = arith.constant 1 : i32
    %c4_i32_9 = arith.constant 4 : i32
    %32 = arith.muli %c1_i32_8, %c4_i32_9 : i32
    %33 = arith.addi %0, %32 : i32
    %c0_i32_10 = arith.constant 0 : i32
    %34 = arith.addi %33, %c0_i32_10 : i32
    %35 = arith.index_cast %34 : i32 to index
    %36 = memref.load %arg1[%35] : memref<32xi32, #tpu.memory_space<smem>>
    %37 = arith.index_cast %36 : i32 to index
    %c0_11 = arith.constant 0 : index
    %38 = vector.load %arg2[%37, %c0_11] : memref<32x32xf32, #tpu.memory_space<vmem>>, vector<1x32xf32>
    %c4_i32_12 = arith.constant 4 : i32
    %39 = arith.muli %c1_i32_8, %c4_i32_12 : i32
    %40 = arith.addi %0, %39 : i32
    %c1_i32_13 = arith.constant 1 : i32
    %41 = arith.addi %40, %c1_i32_13 : i32
    %42 = arith.index_cast %41 : i32 to index
    %43 = memref.load %arg1[%42] : memref<32xi32, #tpu.memory_space<smem>>
    %44 = arith.index_cast %43 : i32 to index
    %c0_14 = arith.constant 0 : index
    %45 = vector.load %arg2[%44, %c0_14] : memref<32x32xf32, #tpu.memory_space<vmem>>, vector<1x32xf32>
    %c4_i32_15 = arith.constant 4 : i32
    %46 = arith.muli %c1_i32_8, %c4_i32_15 : i32
    %47 = arith.addi %0, %46 : i32
    %c2_i32_16 = arith.constant 2 : i32
    %48 = arith.addi %47, %c2_i32_16 : i32
    %49 = arith.index_cast %48 : i32 to index
    %50 = memref.load %arg1[%49] : memref<32xi32, #tpu.memory_space<smem>>
    %51 = arith.index_cast %50 : i32 to index
    %c0_17 = arith.constant 0 : index
    %52 = vector.load %arg2[%51, %c0_17] : memref<32x32xf32, #tpu.memory_space<vmem>>, vector<1x32xf32>
    %c4_i32_18 = arith.constant 4 : i32
    %53 = arith.muli %c1_i32_8, %c4_i32_18 : i32
    %54 = arith.addi %0, %53 : i32
    %c3_i32_19 = arith.constant 3 : i32
    %55 = arith.addi %54, %c3_i32_19 : i32
    %56 = arith.index_cast %55 : i32 to index
    %57 = memref.load %arg1[%56] : memref<32xi32, #tpu.memory_space<smem>>
    %58 = arith.index_cast %57 : i32 to index
    %c0_20 = arith.constant 0 : index
    %59 = vector.load %arg2[%58, %c0_20] : memref<32x32xf32, #tpu.memory_space<vmem>>, vector<1x32xf32>
    %60 = tpu.concatenate %38, %45, %52, %59 in 1 : vector<1x32xf32>, vector<1x32xf32>, vector<1x32xf32>, vector<1x32xf32> -> vector<1x128xf32>
    %61 = arith.index_cast %c1_i32_8 : i32 to index
    %c0_21 = arith.constant 0 : index
    %62 = vector.load %arg3[%61, %c0_21] : memref<8x128xf32, #tpu.memory_space<vmem>>, vector<1x128xf32>
    tpu.vector_store %arg3[%61, %c0_21], %60 {strides = array<i32>} : memref<8x128xf32, #tpu.memory_space<vmem>>, vector<1x128xf32>,
    %c2_i32_22 = arith.constant 2 : i32
    %c4_i32_23 = arith.constant 4 : i32
    %63 = arith.muli %c2_i32_22, %c4_i32_23 : i32
    %64 = arith.addi %0, %63 : i32
    %c0_i32_24 = arith.constant 0 : i32
    %65 = arith.addi %64, %c0_i32_24 : i32
    %66 = arith.index_cast %65 : i32 to index
    %67 = memref.load %arg1[%66] : memref<32xi32, #tpu.memory_space<smem>>
    %68 = arith.index_cast %67 : i32 to index
    %c0_25 = arith.constant 0 : index
    %69 = vector.load %arg2[%68, %c0_25] : memref<32x32xf32, #tpu.memory_space<vmem>>, vector<1x32xf32>
    %c4_i32_26 = arith.constant 4 : i32
    %70 = arith.muli %c2_i32_22, %c4_i32_26 : i32
    %71 = arith.addi %0, %70 : i32
    %c1_i32_27 = arith.constant 1 : i32
    %72 = arith.addi %71, %c1_i32_27 : i32
    %73 = arith.index_cast %72 : i32 to index
    %74 = memref.load %arg1[%73] : memref<32xi32, #tpu.memory_space<smem>>
    %75 = arith.index_cast %74 : i32 to index
    %c0_28 = arith.constant 0 : index
    %76 = vector.load %arg2[%75, %c0_28] : memref<32x32xf32, #tpu.memory_space<vmem>>, vector<1x32xf32>
    %c4_i32_29 = arith.constant 4 : i32
    %77 = arith.muli %c2_i32_22, %c4_i32_29 : i32
    %78 = arith.addi %0, %77 : i32
    %c2_i32_30 = arith.constant 2 : i32
    %79 = arith.addi %78, %c2_i32_30 : i32
    %80 = arith.index_cast %79 : i32 to index
    %81 = memref.load %arg1[%80] : memref<32xi32, #tpu.memory_space<smem>>
    %82 = arith.index_cast %81 : i32 to index
    %c0_31 = arith.constant 0 : index
    %83 = vector.load %arg2[%82, %c0_31] : memref<32x32xf32, #tpu.memory_space<vmem>>, vector<1x32xf32>
    %c4_i32_32 = arith.constant 4 : i32
    %84 = arith.muli %c2_i32_22, %c4_i32_32 : i32
    %85 = arith.addi %0, %84 : i32
    %c3_i32_33 = arith.constant 3 : i32
    %86 = arith.addi %85, %c3_i32_33 : i32
    %87 = arith.index_cast %86 : i32 to index
    %88 = memref.load %arg1[%87] : memref<32xi32, #tpu.memory_space<smem>>
    %89 = arith.index_cast %88 : i32 to index
    %c0_34 = arith.constant 0 : index
    %90 = vector.load %arg2[%89, %c0_34] : memref<32x32xf32, #tpu.memory_space<vmem>>, vector<1x32xf32>
    %91 = tpu.concatenate %69, %76, %83, %90 in 1 : vector<1x32xf32>, vector<1x32xf32>, vector<1x32xf32>, vector<1x32xf32> -> vector<1x128xf32>
    %92 = arith.index_cast %c2_i32_22 : i32 to index
    %c0_35 = arith.constant 0 : index
    %93 = vector.load %arg3[%92, %c0_35] : memref<8x128xf32, #tpu.memory_space<vmem>>, vector<1x128xf32>
    tpu.vector_store %arg3[%92, %c0_35], %91 {strides = array<i32>} : memref<8x128xf32, #tpu.memory_space<vmem>>, vector<1x128xf32>,
    %c3_i32_36 = arith.constant 3 : i32
    %c4_i32_37 = arith.constant 4 : i32
    %94 = arith.muli %c3_i32_36, %c4_i32_37 : i32
    %95 = arith.addi %0, %94 : i32
    %c0_i32_38 = arith.constant 0 : i32
    %96 = arith.addi %95, %c0_i32_38 : i32
    %97 = arith.index_cast %96 : i32 to index
    %98 = memref.load %arg1[%97] : memref<32xi32, #tpu.memory_space<smem>>
    %99 = arith.index_cast %98 : i32 to index
    %c0_39 = arith.constant 0 : index
    %100 = vector.load %arg2[%99, %c0_39] : memref<32x32xf32, #tpu.memory_space<vmem>>, vector<1x32xf32>
    %c4_i32_40 = arith.constant 4 : i32
    %101 = arith.muli %c3_i32_36, %c4_i32_40 : i32
    %102 = arith.addi %0, %101 : i32
    %c1_i32_41 = arith.constant 1 : i32
    %103 = arith.addi %102, %c1_i32_41 : i32
    %104 = arith.index_cast %103 : i32 to index
    %105 = memref.load %arg1[%104] : memref<32xi32, #tpu.memory_space<smem>>
    %106 = arith.index_cast %105 : i32 to index
    %c0_42 = arith.constant 0 : index
    %107 = vector.load %arg2[%106, %c0_42] : memref<32x32xf32, #tpu.memory_space<vmem>>, vector<1x32xf32>
    %c4_i32_43 = arith.constant 4 : i32
    %108 = arith.muli %c3_i32_36, %c4_i32_43 : i32
    %109 = arith.addi %0, %108 : i32
    %c2_i32_44 = arith.constant 2 : i32
    %110 = arith.addi %109, %c2_i32_44 : i32
    %111 = arith.index_cast %110 : i32 to index
    %112 = memref.load %arg1[%111] : memref<32xi32, #tpu.memory_space<smem>>
    %113 = arith.index_cast %112 : i32 to index
    %c0_45 = arith.constant 0 : index
    %114 = vector.load %arg2[%113, %c0_45] : memref<32x32xf32, #tpu.memory_space<vmem>>, vector<1x32xf32>
    %c4_i32_46 = arith.constant 4 : i32
    %115 = arith.muli %c3_i32_36, %c4_i32_46 : i32
    %116 = arith.addi %0, %115 : i32
    %c3_i32_47 = arith.constant 3 : i32
    %117 = arith.addi %116, %c3_i32_47 : i32
    %118 = arith.index_cast %117 : i32 to index
    %119 = memref.load %arg1[%118] : memref<32xi32, #tpu.memory_space<smem>>
    %120 = arith.index_cast %119 : i32 to index
    %c0_48 = arith.constant 0 : index
    %121 = vector.load %arg2[%120, %c0_48] : memref<32x32xf32, #tpu.memory_space<vmem>>, vector<1x32xf32>
    %122 = tpu.concatenate %100, %107, %114, %121 in 1 : vector<1x32xf32>, vector<1x32xf32>, vector<1x32xf32>, vector<1x32xf32> -> vector<1x128xf32>
    %123 = arith.index_cast %c3_i32_36 : i32 to index
    %c0_49 = arith.constant 0 : index
    %124 = vector.load %arg3[%123, %c0_49] : memref<8x128xf32, #tpu.memory_space<vmem>>, vector<1x128xf32>
    tpu.vector_store %arg3[%123, %c0_49], %122 {strides = array<i32>} : memref<8x128xf32, #tpu.memory_space<vmem>>, vector<1x128xf32>,
    %c4_i32_50 = arith.constant 4 : i32
    %c4_i32_51 = arith.constant 4 : i32
    %125 = arith.muli %c4_i32_50, %c4_i32_51 : i32
    %126 = arith.addi %0, %125 : i32
    %c0_i32_52 = arith.constant 0 : i32
    %127 = arith.addi %126, %c0_i32_52 : i32
    %128 = arith.index_cast %127 : i32 to index
    %129 = memref.load %arg1[%128] : memref<32xi32, #tpu.memory_space<smem>>
    %130 = arith.index_cast %129 : i32 to index
    %c0_53 = arith.constant 0 : index
    %131 = vector.load %arg2[%130, %c0_53] : memref<32x32xf32, #tpu.memory_space<vmem>>, vector<1x32xf32>
    %c4_i32_54 = arith.constant 4 : i32
    %132 = arith.muli %c4_i32_50, %c4_i32_54 : i32
    %133 = arith.addi %0, %132 : i32
    %c1_i32_55 = arith.constant 1 : i32
    %134 = arith.addi %133, %c1_i32_55 : i32
    %135 = arith.index_cast %134 : i32 to index
    %136 = memref.load %arg1[%135] : memref<32xi32, #tpu.memory_space<smem>>
    %137 = arith.index_cast %136 : i32 to index
    %c0_56 = arith.constant 0 : index
    %138 = vector.load %arg2[%137, %c0_56] : memref<32x32xf32, #tpu.memory_space<vmem>>, vector<1x32xf32>
    %c4_i32_57 = arith.constant 4 : i32
    %139 = arith.muli %c4_i32_50, %c4_i32_57 : i32
    %140 = arith.addi %0, %139 : i32
    %c2_i32_58 = arith.constant 2 : i32
    %141 = arith.addi %140, %c2_i32_58 : i32
    %142 = arith.index_cast %141 : i32 to index
    %143 = memref.load %arg1[%142] : memref<32xi32, #tpu.memory_space<smem>>
    %144 = arith.index_cast %143 : i32 to index
    %c0_59 = arith.constant 0 : index
    %145 = vector.load %arg2[%144, %c0_59] : memref<32x32xf32, #tpu.memory_space<vmem>>, vector<1x32xf32>
    %c4_i32_60 = arith.constant 4 : i32
    %146 = arith.muli %c4_i32_50, %c4_i32_60 : i32
    %147 = arith.addi %0, %146 : i32
    %c3_i32_61 = arith.constant 3 : i32
    %148 = arith.addi %147, %c3_i32_61 : i32
    %149 = arith.index_cast %148 : i32 to index
    %150 = memref.load %arg1[%149] : memref<32xi32, #tpu.memory_space<smem>>
    %151 = arith.index_cast %150 : i32 to index
    %c0_62 = arith.constant 0 : index
    %152 = vector.load %arg2[%151, %c0_62] : memref<32x32xf32, #tpu.memory_space<vmem>>, vector<1x32xf32>
    %153 = tpu.concatenate %131, %138, %145, %152 in 1 : vector<1x32xf32>, vector<1x32xf32>, vector<1x32xf32>, vector<1x32xf32> -> vector<1x128xf32>
    %154 = arith.index_cast %c4_i32_50 : i32 to index
    %c0_63 = arith.constant 0 : index
    %155 = vector.load %arg3[%154, %c0_63] : memref<8x128xf32, #tpu.memory_space<vmem>>, vector<1x128xf32>
    tpu.vector_store %arg3[%154, %c0_63], %153 {strides = array<i32>} : memref<8x128xf32, #tpu.memory_space<vmem>>, vector<1x128xf32>,
    %c5_i32 = arith.constant 5 : i32
    %c4_i32_64 = arith.constant 4 : i32
    %156 = arith.muli %c5_i32, %c4_i32_64 : i32
    %157 = arith.addi %0, %156 : i32
    %c0_i32_65 = arith.constant 0 : i32
    %158 = arith.addi %157, %c0_i32_65 : i32
    %159 = arith.index_cast %158 : i32 to index
    %160 = memref.load %arg1[%159] : memref<32xi32, #tpu.memory_space<smem>>
    %161 = arith.index_cast %160 : i32 to index
    %c0_66 = arith.constant 0 : index
    %162 = vector.load %arg2[%161, %c0_66] : memref<32x32xf32, #tpu.memory_space<vmem>>, vector<1x32xf32>
    %c4_i32_67 = arith.constant 4 : i32
    %163 = arith.muli %c5_i32, %c4_i32_67 : i32
    %164 = arith.addi %0, %163 : i32
    %c1_i32_68 = arith.constant 1 : i32
    %165 = arith.addi %164, %c1_i32_68 : i32
    %166 = arith.index_cast %165 : i32 to index
    %167 = memref.load %arg1[%166] : memref<32xi32, #tpu.memory_space<smem>>
    %168 = arith.index_cast %167 : i32 to index
    %c0_69 = arith.constant 0 : index
    %169 = vector.load %arg2[%168, %c0_69] : memref<32x32xf32, #tpu.memory_space<vmem>>, vector<1x32xf32>
    %c4_i32_70 = arith.constant 4 : i32
    %170 = arith.muli %c5_i32, %c4_i32_70 : i32
    %171 = arith.addi %0, %170 : i32
    %c2_i32_71 = arith.constant 2 : i32
    %172 = arith.addi %171, %c2_i32_71 : i32
    %173 = arith.index_cast %172 : i32 to index
    %174 = memref.load %arg1[%173] : memref<32xi32, #tpu.memory_space<smem>>
    %175 = arith.index_cast %174 : i32 to index
    %c0_72 = arith.constant 0 : index
    %176 = vector.load %arg2[%175, %c0_72] : memref<32x32xf32, #tpu.memory_space<vmem>>, vector<1x32xf32>
    %c4_i32_73 = arith.constant 4 : i32
    %177 = arith.muli %c5_i32, %c4_i32_73 : i32
    %178 = arith.addi %0, %177 : i32
    %c3_i32_74 = arith.constant 3 : i32
    %179 = arith.addi %178, %c3_i32_74 : i32
    %180 = arith.index_cast %179 : i32 to index
    %181 = memref.load %arg1[%180] : memref<32xi32, #tpu.memory_space<smem>>
    %182 = arith.index_cast %181 : i32 to index
    %c0_75 = arith.constant 0 : index
    %183 = vector.load %arg2[%182, %c0_75] : memref<32x32xf32, #tpu.memory_space<vmem>>, vector<1x32xf32>
    %184 = tpu.concatenate %162, %169, %176, %183 in 1 : vector<1x32xf32>, vector<1x32xf32>, vector<1x32xf32>, vector<1x32xf32> -> vector<1x128xf32>
    %185 = arith.index_cast %c5_i32 : i32 to index
    %c0_76 = arith.constant 0 : index
    %186 = vector.load %arg3[%185, %c0_76] : memref<8x128xf32, #tpu.memory_space<vmem>>, vector<1x128xf32>
    tpu.vector_store %arg3[%185, %c0_76], %184 {strides = array<i32>} : memref<8x128xf32, #tpu.memory_space<vmem>>, vector<1x128xf32>,
    %c6_i32 = arith.constant 6 : i32
    %c4_i32_77 = arith.constant 4 : i32
    %187 = arith.muli %c6_i32, %c4_i32_77 : i32
    %188 = arith.addi %0, %187 : i32
    %c0_i32_78 = arith.constant 0 : i32
    %189 = arith.addi %188, %c0_i32_78 : i32
    %190 = arith.index_cast %189 : i32 to index
    %191 = memref.load %arg1[%190] : memref<32xi32, #tpu.memory_space<smem>>
    %192 = arith.index_cast %191 : i32 to index
    %c0_79 = arith.constant 0 : index
    %193 = vector.load %arg2[%192, %c0_79] : memref<32x32xf32, #tpu.memory_space<vmem>>, vector<1x32xf32>
    %c4_i32_80 = arith.constant 4 : i32
    %194 = arith.muli %c6_i32, %c4_i32_80 : i32
    %195 = arith.addi %0, %194 : i32
    %c1_i32_81 = arith.constant 1 : i32
    %196 = arith.addi %195, %c1_i32_81 : i32
    %197 = arith.index_cast %196 : i32 to index
    %198 = memref.load %arg1[%197] : memref<32xi32, #tpu.memory_space<smem>>
    %199 = arith.index_cast %198 : i32 to index
    %c0_82 = arith.constant 0 : index
    %200 = vector.load %arg2[%199, %c0_82] : memref<32x32xf32, #tpu.memory_space<vmem>>, vector<1x32xf32>
    %c4_i32_83 = arith.constant 4 : i32
    %201 = arith.muli %c6_i32, %c4_i32_83 : i32
    %202 = arith.addi %0, %201 : i32
    %c2_i32_84 = arith.constant 2 : i32
    %203 = arith.addi %202, %c2_i32_84 : i32
    %204 = arith.index_cast %203 : i32 to index
    %205 = memref.load %arg1[%204] : memref<32xi32, #tpu.memory_space<smem>>
    %206 = arith.index_cast %205 : i32 to index
    %c0_85 = arith.constant 0 : index
    %207 = vector.load %arg2[%206, %c0_85] : memref<32x32xf32, #tpu.memory_space<vmem>>, vector<1x32xf32>
    %c4_i32_86 = arith.constant 4 : i32
    %208 = arith.muli %c6_i32, %c4_i32_86 : i32
    %209 = arith.addi %0, %208 : i32
    %c3_i32_87 = arith.constant 3 : i32
    %210 = arith.addi %209, %c3_i32_87 : i32
    %211 = arith.index_cast %210 : i32 to index
    %212 = memref.load %arg1[%211] : memref<32xi32, #tpu.memory_space<smem>>
    %213 = arith.index_cast %212 : i32 to index
    %c0_88 = arith.constant 0 : index
    %214 = vector.load %arg2[%213, %c0_88] : memref<32x32xf32, #tpu.memory_space<vmem>>, vector<1x32xf32>
    %215 = tpu.concatenate %193, %200, %207, %214 in 1 : vector<1x32xf32>, vector<1x32xf32>, vector<1x32xf32>, vector<1x32xf32> -> vector<1x128xf32>
    %216 = arith.index_cast %c6_i32 : i32 to index
    %c0_89 = arith.constant 0 : index
    %217 = vector.load %arg3[%216, %c0_89] : memref<8x128xf32, #tpu.memory_space<vmem>>, vector<1x128xf32>
    tpu.vector_store %arg3[%216, %c0_89], %215 {strides = array<i32>} : memref<8x128xf32, #tpu.memory_space<vmem>>, vector<1x128xf32>,
    %c7_i32 = arith.constant 7 : i32
    %c4_i32_90 = arith.constant 4 : i32
    %218 = arith.muli %c7_i32, %c4_i32_90 : i32
    %219 = arith.addi %0, %218 : i32
    %c0_i32_91 = arith.constant 0 : i32
    %220 = arith.addi %219, %c0_i32_91 : i32
    %221 = arith.index_cast %220 : i32 to index
    %222 = memref.load %arg1[%221] : memref<32xi32, #tpu.memory_space<smem>>
    %223 = arith.index_cast %222 : i32 to index
    %c0_92 = arith.constant 0 : index
    %224 = vector.load %arg2[%223, %c0_92] : memref<32x32xf32, #tpu.memory_space<vmem>>, vector<1x32xf32>
    %c4_i32_93 = arith.constant 4 : i32
    %225 = arith.muli %c7_i32, %c4_i32_93 : i32
    %226 = arith.addi %0, %225 : i32
    %c1_i32_94 = arith.constant 1 : i32
    %227 = arith.addi %226, %c1_i32_94 : i32
    %228 = arith.index_cast %227 : i32 to index
    %229 = memref.load %arg1[%228] : memref<32xi32, #tpu.memory_space<smem>>
    %230 = arith.index_cast %229 : i32 to index
    %c0_95 = arith.constant 0 : index
    %231 = vector.load %arg2[%230, %c0_95] : memref<32x32xf32, #tpu.memory_space<vmem>>, vector<1x32xf32>
    %c4_i32_96 = arith.constant 4 : i32
    %232 = arith.muli %c7_i32, %c4_i32_96 : i32
    %233 = arith.addi %0, %232 : i32
    %c2_i32_97 = arith.constant 2 : i32
    %234 = arith.addi %233, %c2_i32_97 : i32
    %235 = arith.index_cast %234 : i32 to index
    %236 = memref.load %arg1[%235] : memref<32xi32, #tpu.memory_space<smem>>
    %237 = arith.index_cast %236 : i32 to index
    %c0_98 = arith.constant 0 : index
    %238 = vector.load %arg2[%237, %c0_98] : memref<32x32xf32, #tpu.memory_space<vmem>>, vector<1x32xf32>
    %c4_i32_99 = arith.constant 4 : i32
    %239 = arith.muli %c7_i32, %c4_i32_99 : i32
    %240 = arith.addi %0, %239 : i32
    %c3_i32_100 = arith.constant 3 : i32
    %241 = arith.addi %240, %c3_i32_100 : i32
    %242 = arith.index_cast %241 : i32 to index
    %243 = memref.load %arg1[%242] : memref<32xi32, #tpu.memory_space<smem>>
    %244 = arith.index_cast %243 : i32 to index
    %c0_101 = arith.constant 0 : index
    %245 = vector.load %arg2[%244, %c0_101] : memref<32x32xf32, #tpu.memory_space<vmem>>, vector<1x32xf32>
    %246 = tpu.concatenate %224, %231, %238, %245 in 1 : vector<1x32xf32>, vector<1x32xf32>, vector<1x32xf32>, vector<1x32xf32> -> vector<1x128xf32>
    %247 = arith.index_cast %c7_i32 : i32 to index
    %c0_102 = arith.constant 0 : index
    %248 = vector.load %arg3[%247, %c0_102] : memref<8x128xf32, #tpu.memory_space<vmem>>, vector<1x128xf32>
    tpu.vector_store %arg3[%247, %c0_102], %246 {strides = array<i32>} : memref<8x128xf32, #tpu.memory_space<vmem>>, vector<1x128xf32>,
    %c8_i32 = arith.constant 8 : i32
    %c0_103 = arith.constant 0 : index
    %c0_104 = arith.constant 0 : index
    %249 = vector.load %arg3[%c0_103, %c0_104] : memref<8x128xf32, #tpu.memory_space<vmem>>, vector<8x128xf32>
    %250 = vector.extract_strided_slice %249 {offsets = [0, 0], sizes = [8, 32], strides = [1, 1]} : vector<8x128xf32> to vector<8x32xf32>
    %251 = arith.mulf %250, %250 : vector<8x32xf32>
    %cst = arith.constant dense<0.000000e+00> : vector<8xf32>
    %252 = vector.multi_reduction <add>, %251, %cst [1] : vector<8x32xf32> to vector<8xf32>
    %253 = vector.shape_cast %252 : vector<8xf32> to vector<8x1xf32>
    %254 = math.rsqrt %253 : vector<8x1xf32>
    %255 = vector.broadcast %254 : vector<8x1xf32> to vector<8x32xf32>
    %256 = arith.mulf %250, %255 : vector<8x32xf32>
    %257 = vector.extract_strided_slice %249 {offsets = [0, 32], sizes = [8, 32], strides = [1, 1]} : vector<8x128xf32> to vector<8x32xf32>
    %258 = arith.mulf %257, %257 : vector<8x32xf32>
    %cst_105 = arith.constant dense<0.000000e+00> : vector<8xf32>
    %259 = vector.multi_reduction <add>, %258, %cst_105 [1] : vector<8x32xf32> to vector<8xf32>
    %260 = vector.shape_cast %259 : vector<8xf32> to vector<8x1xf32>
    %261 = math.rsqrt %260 : vector<8x1xf32>
    %262 = vector.broadcast %261 : vector<8x1xf32> to vector<8x32xf32>
    %263 = arith.mulf %257, %262 : vector<8x32xf32>
    %264 = vector.extract_strided_slice %249 {offsets = [0, 64], sizes = [8, 32], strides = [1, 1]} : vector<8x128xf32> to vector<8x32xf32>
    %265 = arith.mulf %264, %264 : vector<8x32xf32>
    %cst_106 = arith.constant dense<0.000000e+00> : vector<8xf32>
    %266 = vector.multi_reduction <add>, %265, %cst_106 [1] : vector<8x32xf32> to vector<8xf32>
    %267 = vector.shape_cast %266 : vector<8xf32> to vector<8x1xf32>
    %268 = math.rsqrt %267 : vector<8x1xf32>
    %269 = vector.broadcast %268 : vector<8x1xf32> to vector<8x32xf32>
    %270 = arith.mulf %264, %269 : vector<8x32xf32>
    %271 = vector.extract_strided_slice %249 {offsets = [0, 96], sizes = [8, 32], strides = [1, 1]} : vector<8x128xf32> to vector<8x32xf32>
    %272 = arith.mulf %271, %271 : vector<8x32xf32>
    %cst_107 = arith.constant dense<0.000000e+00> : vector<8xf32>
    %273 = vector.multi_reduction <add>, %272, %cst_107 [1] : vector<8x32xf32> to vector<8xf32>
    %274 = vector.shape_cast %273 : vector<8xf32> to vector<8x1xf32>
    %275 = math.rsqrt %274 : vector<8x1xf32>
    %276 = vector.broadcast %275 : vector<8x1xf32> to vector<8x32xf32>
    %277 = arith.mulf %271, %276 : vector<8x32xf32>
    %278 = tpu.concatenate %256, %263, %270, %277 in 1 : vector<8x32xf32>, vector<8x32xf32>, vector<8x32xf32>, vector<8x32xf32> -> vector<8x128xf32>
    %c0_108 = arith.constant 0 : index
    %c0_109 = arith.constant 0 : index
    %279 = vector.load %arg3[%c0_108, %c0_109] : memref<8x128xf32, #tpu.memory_space<vmem>>, vector<8x128xf32>
    tpu.vector_store %arg3[%c0_108, %c0_109], %278 {strides = array<i32>} : memref<8x128xf32, #tpu.memory_space<vmem>>, vector<8x128xf32>,
    return
  }
  func.func @transform_0(%arg0: i32, %arg1: memref<32xi32, #tpu.memory_space<smem>>) -> (i32, i32) {
    %c0_i32 = arith.constant 0 : i32
    %c0_i32_0 = arith.constant 0 : i32
    %c0_i32_1 = arith.constant 0 : i32
    return %c0_i32, %c0_i32_0 : i32, i32
  }
  func.func @transform_1(%arg0: i32, %arg1: memref<32xi32, #tpu.memory_space<smem>>) -> (i32, i32) {
    %c0_i32 = arith.constant 0 : i32
    %c0_i32_0 = arith.constant 0 : i32
    return %arg0, %c0_i32 : i32, i32
  }
}

</mosaic_0001>

<llo_original>
// kernel: tpu_custom_call.1
$region0: #{tpu_custom_call.1}
  #allocation0 [shape = 'u32[]', space=smem, size = 0x4, offset = 0x4, fixed_abs, tag = 'smem constant byte address 0x4 - core index']
  #allocation1 [shape = 'u32[72,128]{1,0:T(1,128)}', space=vmem, size = 0x9000, scoped, tag = 'internal scratch']
  #allocation2 [shape = 's32[1]{0}', space=sflag, size = 0x4, scoped, tag = 'scoped memory for tpu_custom_call.1']
  #allocation3 [shape = 'u8[512]{0}', space=smem, size = 0x200, scoped, tag = 'prefetched SMEM operand 0']
  %s0 = inlined_call_operand.hbm [shape: s32[32], index: 0, kind: input, shape index: {}]
  %s1 = inlined_call_operand.hbm [shape: f32[32,32], index: 1, kind: input, shape index: {}]
  %s2 = inlined_call_operand.hbm [shape: f32[8,128], index: 2, kind: output, shape index: {}]
  %s3 = sld [smem:[#allocation0]]
  $region18: #{tpu_custom_call.1} parent=0
    _
  %s5 = ssub.s32 1, %s3
  %s6 = scalar_select 0, %s5, %s3
  %s8 = sshll.u32 %s0, 4
  %s9 = int_to_ptr.hbm [resolvable:$true] %s8
  %11 = dma.hbm_to_smem %s9, 16, [#allocation3], [#allocation2]
  %13 = dma.done [#allocation2], 16
  %14 = sfence
  $region1: #{tpu_custom_call.1} parent=0
    #allocation4 [shape = 'u8[16384]{0}', space=vmem, size = 0x4000, scoped, tag = 'input window, operand 1, single buffered']
    #allocation5 [shape = 's32[1]{0}', space=sflag, size = 0x4, scoped, tag = 'scoped memory for tpu_custom_call.1']
    #allocation6 [shape = 's32[1]{0}', space=sflag, size = 0x4, scoped, tag = 'scoped memory for tpu_custom_call.1']
    #allocation7 [shape = 'u8[4096]{0}', space=vmem, size = 0x1000, scoped, tag = 'output window, operand 0, single buffered']
    %15 = vsyncpa [#allocation5], 0
    %16 = vsyncpa [#allocation6], 0
    // Predicated region
    $region2: #{tpu_custom_call.1} parent=1 // pred_check
      _
    $region3: #{tpu_custom_call.1} parent=1 // pred_check_branch
      %18 = sbr.rel (0) target = $region5
    $region4: #{tpu_custom_call.1} parent=1 // pred_region
      %20 = vsyncadd [#allocation5], 0
      %s21 = sshll.u32 %s1, 4
      %s22 = int_to_ptr.hbm [resolvable:$true] %s21
      %s23 = sshll.u32 [#allocation4], 4
      %s24 = int_to_ptr.vmem [resolvable:$true] %s23
      %29 = dma.hbm_to_vmem [thread:$0]  %s22, 512, %s24, [#allocation5], 128, 128, 8
    $region5: #{tpu_custom_call.1} parent=1 // pred_fallthru
      _
    // Predicated region
    $region6: #{tpu_custom_call.1} parent=1 // pred_check
      _
    $region7: #{tpu_custom_call.1} parent=1 // pred_check_branch
      %31 = sbr.rel (0) target = $region9
    $region8: #{tpu_custom_call.1} parent=1 // pred_region
      %33 = dma.done [#allocation5], 512
    $region9: #{tpu_custom_call.1} parent=1 // pred_fallthru
      _
    %s34 = smul.u32 0, 32
    %s35 = sld [smem:[#allocation3 + %s34]]
    %s36 = scalar_lea.vmem [#allocation4], %s35
    %v37 = vld [vmem:[%s36] sm:$0x1]
    %s38 = sadd.s32 %s34, 1
    %s39 = sld [smem:[#allocation3 + %s38]]
    %s40 = scalar_lea.vmem [#allocation4], %s39
    %v41 = vld [vmem:[%s40] sm:$0x1]
    %s42 = sadd.s32 %s34, 2
    %s43 = sld [smem:[#allocation3 + %s42]]
    %s44 = scalar_lea.vmem [#allocation4], %s43
    %v45 = vld [vmem:[%s44] sm:$0x1]
    %s46 = sadd.s32 %s34, 3
    %s47 = sld [smem:[#allocation3 + %s46]]
    %s48 = scalar_lea.vmem [#allocation4], %s47
    %v49 = vld [vmem:[%s48] sm:$0x1]
    %51 = vrot.lane.b32.xlu0 %v41, 32
    %v52 = vpop.permute.xlu0 %51
    %55 = vrot.lane.b32.xlu0 %v45, 64
    %v56 = vpop.permute.xlu0 %55
    %59 = vrot.lane.b32.xlu0 %v49, 96
    %v60 = vpop.permute.xlu0 %59
    %vm62 = vcmask 261120
    %v63 = vsel %vm62, %v37, %v52
    %vm64 = vcmask 523264
    %v65 = vsel %vm64, %v63, %v56
    %vm66 = vcmask 785408
    %v67 = vsel %vm66, %v65, %v60
    %68 = vst [vmem:[#allocation7] sm:$0x1] %v67
    %s69 = sadd.s32 %s34, 4
    %s70 = sld [smem:[#allocation3 + %s69]]
    %s71 = scalar_lea.vmem [#allocation4], %s70
    %v72 = vld [vmem:[%s71] sm:$0x1]
    %s73 = sadd.s32 %s34, 5
    %s74 = sld [smem:[#allocation3 + %s73]]
    %s75 = scalar_lea.vmem [#allocation4], %s74
    %v76 = vld [vmem:[%s75] sm:$0x1]
    %s77 = sadd.s32 %s34, 6
    %s78 = sld [smem:[#allocation3 + %s77]]
    %s79 = scalar_lea.vmem [#allocation4], %s78
    %v80 = vld [vmem:[%s79] sm:$0x1]
    %s81 = sadd.s32 %s34, 7
    %s82 = sld [smem:[#allocation3 + %s81]]
    %s83 = scalar_lea.vmem [#allocation4], %s82
    %v84 = vld [vmem:[%s83] sm:$0x1]
    %86 = vrot.lane.b32.xlu0 %v76, 32
    %v87 = vpop.permute.xlu0 %86
    %90 = vrot.lane.b32.xlu0 %v80, 64
    %v91 = vpop.permute.xlu0 %90
    %94 = vrot.lane.b32.xlu0 %v84, 96
    %v95 = vpop.permute.xlu0 %94
    %v97 = vsel %vm62, %v72, %v87
    %v98 = vsel %vm64, %v97, %v91
    %v99 = vsel %vm66, %v98, %v95
    %100 = vst [vmem:[#allocation7 + $0x1] sm:$0x1] %v99
    %s101 = sadd.s32 %s34, 8
    %s102 = sld [smem:[#allocation3 + %s101]]
    %s103 = scalar_lea.vmem [#allocation4], %s102
    %v104 = vld [vmem:[%s103] sm:$0x1]
    %s105 = sadd.s32 %s34, 9
    %s106 = sld [smem:[#allocation3 + %s105]]
    %s107 = scalar_lea.vmem [#allocation4], %s106
    %v108 = vld [vmem:[%s107] sm:$0x1]
    %s109 = sadd.s32 %s34, 10
    %s110 = sld [smem:[#allocation3 + %s109]]
    %s111 = scalar_lea.vmem [#allocation4], %s110
    %v112 = vld [vmem:[%s111] sm:$0x1]
    %s113 = sadd.s32 %s34, 11
    %s114 = sld [smem:[#allocation3 + %s113]]
    %s115 = scalar_lea.vmem [#allocation4], %s114
    %v116 = vld [vmem:[%s115] sm:$0x1]
    %118 = vrot.lane.b32.xlu0 %v108, 32
    %v119 = vpop.permute.xlu0 %118
    %122 = vrot.lane.b32.xlu0 %v112, 64
    %v123 = vpop.permute.xlu0 %122
    %126 = vrot.lane.b32.xlu0 %v116, 96
    %v127 = vpop.permute.xlu0 %126
    %v129 = vsel %vm62, %v104, %v119
    %v130 = vsel %vm64, %v129, %v123
    %v131 = vsel %vm66, %v130, %v127
    %132 = vst [vmem:[#allocation7 + $0x2] sm:$0x1] %v131
    %s133 = sadd.s32 %s34, 12
    %s134 = sld [smem:[#allocation3 + %s133]]
    %s135 = scalar_lea.vmem [#allocation4], %s134
    %v136 = vld [vmem:[%s135] sm:$0x1]
    %s137 = sadd.s32 %s34, 13
    %s138 = sld [smem:[#allocation3 + %s137]]
    %s139 = scalar_lea.vmem [#allocation4], %s138
    %v140 = vld [vmem:[%s139] sm:$0x1]
    %s141 = sadd.s32 %s34, 14
    %s142 = sld [smem:[#allocation3 + %s141]]
    %s143 = scalar_lea.vmem [#allocation4], %s142
    %v144 = vld [vmem:[%s143] sm:$0x1]
    %s145 = sadd.s32 %s34, 15
    %s146 = sld [smem:[#allocation3 + %s145]]
    %s147 = scalar_lea.vmem [#allocation4], %s146
    %v148 = vld [vmem:[%s147] sm:$0x1]
    %150 = vrot.lane.b32.xlu0 %v140, 32
    %v151 = vpop.permute.xlu0 %150
    %154 = vrot.lane.b32.xlu0 %v144, 64
    %v155 = vpop.permute.xlu0 %154
    %158 = vrot.lane.b32.xlu0 %v148, 96
    %v159 = vpop.permute.xlu0 %158
    %v161 = vsel %vm62, %v136, %v151
    %v162 = vsel %vm64, %v161, %v155
    %v163 = vsel %vm66, %v162, %v159
    %164 = vst [vmem:[#allocation7 + $0x3] sm:$0x1] %v163
    %s165 = sadd.s32 %s34, 16
    %s166 = sld [smem:[#allocation3 + %s165]]
    %s167 = scalar_lea.vmem [#allocation4], %s166
    %v168 = vld [vmem:[%s167] sm:$0x1]
    %s169 = sadd.s32 %s34, 17
    %s170 = sld [smem:[#allocation3 + %s169]]
    %s171 = scalar_lea.vmem [#allocation4], %s170
    %v172 = vld [vmem:[%s171] sm:$0x1]
    %s173 = sadd.s32 %s34, 18
    %s174 = sld [smem:[#allocation3 + %s173]]
    %s175 = scalar_lea.vmem [#allocation4], %s174
    %v176 = vld [vmem:[%s175] sm:$0x1]
    %s177 = sadd.s32 %s34, 19
    %s178 = sld [smem:[#allocation3 + %s177]]
    %s179 = scalar_lea.vmem [#allocation4], %s178
    %v180 = vld [vmem:[%s179] sm:$0x1]
    %182 = vrot.lane.b32.xlu0 %v172, 32
    %v183 = vpop.permute.xlu0 %182
    %186 = vrot.lane.b32.xlu0 %v176, 64
    %v187 = vpop.permute.xlu0 %186
    %190 = vrot.lane.b32.xlu0 %v180, 96
    %v191 = vpop.permute.xlu0 %190
    %v193 = vsel %vm62, %v168, %v183
    %v194 = vsel %vm64, %v193, %v187
    %v195 = vsel %vm66, %v194, %v191
    %196 = vst [vmem:[#allocation7 + $0x4] sm:$0x1] %v195
    %s197 = sadd.s32 %s34, 20
    %s198 = sld [smem:[#allocation3 + %s197]]
    %s199 = scalar_lea.vmem [#allocation4], %s198
    %v200 = vld [vmem:[%s199] sm:$0x1]
    %s201 = sadd.s32 %s34, 21
    %s202 = sld [smem:[#allocation3 + %s201]]
    %s203 = scalar_lea.vmem [#allocation4], %s202
    %v204 = vld [vmem:[%s203] sm:$0x1]
    %s205 = sadd.s32 %s34, 22
    %s206 = sld [smem:[#allocation3 + %s205]]
    %s207 = scalar_lea.vmem [#allocation4], %s206
    %v208 = vld [vmem:[%s207] sm:$0x1]
    %s209 = sadd.s32 %s34, 23
    %s210 = sld [smem:[#allocation3 + %s209]]
    %s211 = scalar_lea.vmem [#allocation4], %s210
    %v212 = vld [vmem:[%s211] sm:$0x1]
    %214 = vrot.lane.b32.xlu0 %v204, 32
    %v215 = vpop.permute.xlu0 %214
    %218 = vrot.lane.b32.xlu0 %v208, 64
    %v219 = vpop.permute.xlu0 %218
    %222 = vrot.lane.b32.xlu0 %v212, 96
    %v223 = vpop.permute.xlu0 %222
    %v225 = vsel %vm62, %v200, %v215
    %v226 = vsel %vm64, %v225, %v219
    %v227 = vsel %vm66, %v226, %v223
    %228 = vst [vmem:[#allocation7 + $0x5] sm:$0x1] %v227
    %s229 = sadd.s32 %s34, 24
    %s230 = sld [smem:[#allocation3 + %s229]]
    %s231 = scalar_lea.vmem [#allocation4], %s230
    %v232 = vld [vmem:[%s231] sm:$0x1]
    %s233 = sadd.s32 %s34, 25
    %s234 = sld [smem:[#allocation3 + %s233]]
    %s235 = scalar_lea.vmem [#allocation4], %s234
    %v236 = vld [vmem:[%s235] sm:$0x1]
    %s237 = sadd.s32 %s34, 26
    %s238 = sld [smem:[#allocation3 + %s237]]
    %s239 = scalar_lea.vmem [#allocation4], %s238
    %v240 = vld [vmem:[%s239] sm:$0x1]
    %s241 = sadd.s32 %s34, 27
    %s242 = sld [smem:[#allocation3 + %s241]]
    %s243 = scalar_lea.vmem [#allocation4], %s242
    %v244 = vld [vmem:[%s243] sm:$0x1]
    %246 = vrot.lane.b32.xlu0 %v236, 32
    %v247 = vpop.permute.xlu0 %246
    %250 = vrot.lane.b32.xlu0 %v240, 64
    %v251 = vpop.permute.xlu0 %250
    %254 = vrot.lane.b32.xlu0 %v244, 96
    %v255 = vpop.permute.xlu0 %254
    %v257 = vsel %vm62, %v232, %v247
    %v258 = vsel %vm64, %v257, %v251
    %v259 = vsel %vm66, %v258, %v255
    %260 = vst [vmem:[#allocation7 + $0x6] sm:$0x1] %v259
    %s261 = sadd.s32 %s34, 28
    %s262 = sld [smem:[#allocation3 + %s261]]
    %s263 = scalar_lea.vmem [#allocation4], %s262
    %v264 = vld [vmem:[%s263] sm:$0x1]
    %s265 = sadd.s32 %s34, 29
    %s266 = sld [smem:[#allocation3 + %s265]]
    %s267 = scalar_lea.vmem [#allocation4], %s266
    %v268 = vld [vmem:[%s267] sm:$0x1]
    %s269 = sadd.s32 %s34, 30
    %s270 = sld [smem:[#allocation3 + %s269]]
    %s271 = scalar_lea.vmem [#allocation4], %s270
    %v272 = vld [vmem:[%s271] sm:$0x1]
    %s273 = sadd.s32 %s34, 31
    %s274 = sld [smem:[#allocation3 + %s273]]
    %s275 = scalar_lea.vmem [#allocation4], %s274
    %v276 = vld [vmem:[%s275] sm:$0x1]
    %278 = vrot.lane.b32.xlu0 %v268, 32
    %v279 = vpop.permute.xlu0 %278
    %282 = vrot.lane.b32.xlu0 %v272, 64
    %v283 = vpop.permute.xlu0 %282
    %286 = vrot.lane.b32.xlu0 %v276, 96
    %v287 = vpop.permute.xlu0 %286
    %v289 = vsel %vm62, %v264, %v279
    %v290 = vsel %vm64, %v289, %v283
    %v291 = vsel %vm66, %v290, %v287
    %292 = vst [vmem:[#allocation7 + $0x7] sm:$0x1] %v291
    %v293 = vld [vmem:[#allocation7] sm:$0xff]
    %v294 = vmul.f32 %v293, %v293
    %v295 = vsel %vm62, %v294, 0.0
    %296 = vadd.xlane.f32.xlu0 %v295
    %v297 = vpop.xlane.xlu0 %296
    %v298 = vrsqrt.pop %v297
    %v299 = vmul.f32 %v298, %v297
    %v300 = vmul.f32 %v299, %v298
    %v301 = vmul.f32 0.5, %v300
    %v302 = vsub.f32 1.5, %v301
    %v303 = vmul.f32 %v298, %v302
    %vm304 = vweird.f32 %v297
    %vm305 = vweird.f32 %v298
    %vm306 = vmor %vm304, %vm305
    %v307 = vsel %vm306, %v298, %v303
    %v308 = vmul.f32 %v293, %v307
    %310 = vrot.lane.b32.xlu0 %v294, 96
    %v311 = vpop.permute.xlu0 %310
    %v313 = vsel %vm62, %v311, 0.0
    %314 = vadd.xlane.f32.xlu0 %v313
    %v315 = vpop.xlane.xlu0 %314
    %v316 = vrsqrt.pop %v315
    %v317 = vmul.f32 %v316, %v315
    %v318 = vmul.f32 %v317, %v316
    %v319 = vmul.f32 0.5, %v318
    %v320 = vsub.f32 1.5, %v319
    %v321 = vmul.f32 %v316, %v320
    %vm322 = vweird.f32 %v315
    %vm323 = vweird.f32 %v316
    %vm324 = vmor %vm322, %vm323
    %v325 = vsel %vm324, %v316, %v321
    %v326 = vmul.f32 %v293, %v325
    %327 = vrot.lane.b32.xlu0 %v294, 64
    %v328 = vpop.permute.xlu0 %327
    %v330 = vsel %vm62, %v328, 0.0
    %331 = vadd.xlane.f32.xlu0 %v330
    %v332 = vpop.xlane.xlu0 %331
    %v333 = vrsqrt.pop %v332
    %v334 = vmul.f32 %v333, %v332
    %v335 = vmul.f32 %v334, %v333
    %v336 = vmul.f32 0.5, %v335
    %v337 = vsub.f32 1.5, %v336
    %v338 = vmul.f32 %v333, %v337
    %vm339 = vweird.f32 %v332
    %vm340 = vweird.f32 %v333
    %vm341 = vmor %vm339, %vm340
    %v342 = vsel %vm341, %v333, %v338
    %v343 = vmul.f32 %v293, %v342
    %344 = vrot.lane.b32.xlu0 %v294, 32
    %v345 = vpop.permute.xlu0 %344
    %v347 = vsel %vm62, %v345, 0.0
    %348 = vadd.xlane.f32.xlu0 %v347
    %v349 = vpop.xlane.xlu0 %348
    %v350 = vrsqrt.pop %v349
    %v351 = vmul.f32 %v350, %v349
    %v352 = vmul.f32 %v351, %v350
    %v353 = vmul.f32 0.5, %v352
    %v354 = vsub.f32 1.5, %v353
    %v355 = vmul.f32 %v350, %v354
    %vm356 = vweird.f32 %v349
    %vm357 = vweird.f32 %v350
    %vm358 = vmor %vm356, %vm357
    %v359 = vsel %vm358, %v350, %v355
    %v360 = vmul.f32 %v293, %v359
    %v361 = vsel %vm62, %v308, %v326
    %v362 = vsel %vm64, %v361, %v343
    %v363 = vsel %vm66, %v362, %v360
    %364 = vst [vmem:[#allocation7] sm:$0xff] %v363
    // Predicated region
    $region10: #{tpu_custom_call.1} parent=1 // pred_check
      _
    $region11: #{tpu_custom_call.1} parent=1 // pred_check_branch
      %366 = sbr.rel (0) target = $region13
    $region12: #{tpu_custom_call.1} parent=1 // pred_region
      %368 = vsyncadd [#allocation6], 0
      %s370 = sshll.u32 [#allocation7], 4
      %s371 = int_to_ptr.vmem [resolvable:$true] %s370
      %s372 = sshll.u32 %s2, 4
      %s373 = int_to_ptr.hbm [resolvable:$true] %s372
      %375 = dma.vmem_to_hbm [thread:$0]  %s371, 128, %s373, [#allocation6]
    $region13: #{tpu_custom_call.1} parent=1 // pred_fallthru
      _
    // Predicated region
    $region14: #{tpu_custom_call.1} parent=1 // pred_check
      _
    $region15: #{tpu_custom_call.1} parent=1 // pred_check_branch
      %377 = sbr.rel (0) target = $region17
    $region16: #{tpu_custom_call.1} parent=1 // pred_region
      %379 = dma.done [#allocation6], 128
    $region17: #{tpu_custom_call.1} parent=1 // pred_fallthru
      _
    %380 = vsyncpa [#allocation5], 1
    %381 = vsyncpa [#allocation6], 1

</llo_original>
